<compile_context>
chip_gen: v7x
topology: tpu7x:2x2x1
jax: 0.10.0
libtpu: 0.0.40
codegen_flags: <defaults>
</compile_context>

<pallas_src>
import functools

import jax
import jax.numpy as jnp
from jax import lax
from jax.experimental import pallas as pl
from jax.experimental.pallas import tpu as pltpu

PAIRWISE_EPS = 1e-6  # matches torch.nn.functional.pairwise_distance default eps
_LANE = 128
_SUBLANE = 8
_NUM_CORES = 2  # v7x megacore; the extra axis is serialized (cheap) on v5e/v6e


def _vmem_limit_bytes():
    """Scoped-VMEM limit, generation aware: 64 MiB on 128-MiB-VMEM chips
    (v5e/v6e), 40 MiB on 64-MiB-VMEM chips (v7x).  Conservative fallback."""
    cap = 64 << 20
    try:
        cap = int(getattr(pltpu.get_tpu_info(), "vmem_capacity_bytes", cap))
    except Exception:  # hardware query unavailable -> assume smallest (v7x)
        pass
    return (64 << 20) if cap >= (100 << 20) else (40 << 20)


def _choose_tile_b(batch, dim, itemsize, vmem_limit):
    """Largest batch tile whose full pipeline footprint (2 inputs x 2 pipeline
    buffers + f32 intermediates + label/accumulator buffers) fits the scoped
    VMEM budget.  Sized against the 128-lane-padded width, which is what both
    the VMEM blocks and the tiled HBM layout actually cost."""
    d_pad = max(_LANE, ((dim + _LANE - 1) // _LANE) * _LANE)
    budget = vmem_limit - (8 << 20)          # headroom for compiler scratch etc.
    row_cost = 4 * d_pad * itemsize          # 2 inputs x 2 pipeline buffers
    row_cost += 4 * d_pad * 4                # f32 upcast / diff / squared temps
    row_cost += 4 * _LANE * 4                # accumulator + label bufs + (TB,1) temps
    tb = budget // row_cost
    tb = max(_SUBLANE, (tb // _SUBLANE) * _SUBLANE)
    if tb >= batch:
        return int(batch)                    # single full-dim block (always legal)
    return int(tb)


def _contrastive_loss_kernel(o1_ref, o2_ref, label_ref, out_ref, acc_ref,
                             *, batch, tile_b, margin):
    c = pl.program_id(0)                     # core / partial-sum index
    k = pl.program_id(1)                     # batch-tile index within this core
    steps_per_core = pl.num_programs(1)

    @pl.when(k == 0)
    def _():
        acc_ref[...] = jnp.zeros_like(acc_ref)

    # Upcast in-kernel (inputs may be bf16). eps is added to the diff exactly
    # as F.pairwise_distance does: ||x1 - x2 + eps||_2.
    o1 = o1_ref[...].astype(jnp.float32)
    o2 = o2_ref[...].astype(jnp.float32)
    lbl = label_ref[...].astype(jnp.float32)

    # Validity of each row of this tile (remainder / phantom tiles).
    row = (c * steps_per_core + k) * tile_b + lax.broadcasted_iota(
        jnp.int32, (tile_b, 1), 0)
    valid = row < batch                                               # (TB, 1)

    diff = o1 - o2 + PAIRWISE_EPS                                     # (TB, D)
    dist = jnp.sqrt(jnp.sum(diff * diff, axis=-1, keepdims=True))     # (TB, 1)
    lbl = jnp.where(valid, lbl, 0.0)
    hinge = jnp.maximum(margin - dist, 0.0)
    per_pair = (1.0 - lbl) * (dist * dist) + lbl * (hinge * hinge)    # (TB, 1)
    # Select (not multiply) so NaN/Inf garbage in out-of-bounds rows is squashed.
    per_pair = jnp.where(valid, per_pair, 0.0)

    acc_ref[...] += per_pair

    @pl.when(k == steps_per_core - 1)
    def _():
        partial = jnp.sum(acc_ref[...])
        out_ref[...] = jnp.broadcast_to(partial, out_ref.shape)


def contrastive_loss(output1, output2, label, *, margin=2.0, tile_b=None):
    """output1, output2: (B, D); label: (B,) or (B, 1) -> scalar f32 loss."""
    B, D = output1.shape
    assert output2.shape == (B, D)
    label = label.reshape(B, 1)

    vmem_limit = _vmem_limit_bytes()
    if tile_b is None:
        tb = _choose_tile_b(B, D, jnp.dtype(output1.dtype).itemsize, vmem_limit)
    else:
        tb = int(min(tile_b, B))
        assert tb == B or tb % _SUBLANE == 0, "tile_b must be a multiple of 8 or >= B"

    n_tiles = pl.cdiv(B, tb)
    steps_per_core = pl.cdiv(B, _NUM_CORES * tb)
    grid = (_NUM_CORES, steps_per_core)

    def _block_idx(c, k):
        # Clamp phantom tiles (past the end of the batch) onto the last real
        # tile; their rows are fully masked inside the kernel.
        return (jnp.minimum(c * steps_per_core + k, n_tiles - 1), 0)

    kernel = functools.partial(
        _contrastive_loss_kernel, batch=B, tile_b=tb, margin=float(margin))

    partials = pl.pallas_call(
        kernel,
        out_shape=jax.ShapeDtypeStruct((_NUM_CORES, 1, _LANE), jnp.float32),
        grid=grid,
        in_specs=[
            pl.BlockSpec((tb, D), _block_idx),
            pl.BlockSpec((tb, D), _block_idx),
            pl.BlockSpec((tb, 1), _block_idx),
        ],
        out_specs=pl.BlockSpec((1, 1, _LANE), lambda c, k: (c, 0, 0)),
        scratch_shapes=[pltpu.VMEM((tb, 1), jnp.float32)],
        compiler_params=pltpu.CompilerParams(
            # Core axis is parallel (megacore sharding on v7x); batch-tile axis
            # carries the running-sum accumulator -> reduction ("arbitrary").
            dimension_semantics=("parallel", "arbitrary"),
            vmem_limit_bytes=vmem_limit,
        ),
    )(output1, output2, label)

    # Per-core partial sums -> mean over the true batch size.
    return jnp.sum(partials[:, 0, 0]) / B


def contrastive_loss_ref(output1, output2, label, margin=2.0):
    """Pure-JAX reference mirroring the PyTorch module."""
    o1 = output1.astype(jnp.float32)
    o2 = output2.astype(jnp.float32)
    diff = o1 - o2 + PAIRWISE_EPS
    dist = jnp.sqrt(jnp.sum(diff * diff, axis=-1, keepdims=True))
    label = label.reshape(-1, 1).astype(jnp.float32)
    per_pair = (1.0 - label) * dist**2 + label * jnp.clip(margin - dist, 0.0) ** 2
    return jnp.mean(per_pair)


if __name__ == "__main__":
    key = jax.random.PRNGKey(0)
    k1, k2, k3, k4, k5, k6, k7, k8, k9 = jax.random.split(key, 9)

    # Small case matching the module's expected use (B pairs of D-dim embeddings).
    B, D = 8, 32
    output1 = jax.random.normal(k1, (B, D), dtype=jnp.float32)
    output2 = jax.random.normal(k2, (B, D), dtype=jnp.float32)
    label = jax.random.bernoulli(k3, 0.5, (B, 1)).astype(jnp.float32)

    loss = contrastive_loss(output1, output2, label)
    jax.block_until_ready(loss)
    ref = contrastive_loss_ref(output1, output2, label)
    assert jnp.allclose(loss, ref, rtol=2e-5, atol=1e-5), (loss, ref)

    # Tiled / remainder-masked / multi-step-per-core path (B % TB != 0).
    B2, D2 = 20, 32
    o1b = jax.random.normal(k4, (B2, D2), dtype=jnp.float32)
    o2b = jax.random.normal(k5, (B2, D2), dtype=jnp.float32)
    lblb = jax.random.bernoulli(k6, 0.5, (B2, 1)).astype(jnp.float32)

    loss2 = contrastive_loss(o1b, o2b, lblb, tile_b=8)
    jax.block_until_ready(loss2)
    ref2 = contrastive_loss_ref(o1b, o2b, lblb)
    assert jnp.allclose(loss2, ref2, rtol=2e-5, atol=1e-5), (loss2, ref2)

    # bf16 inputs exercise the in-kernel upcast path.
    B3, D3 = 16, 64
    o1c = jax.random.normal(k7, (B3, D3), dtype=jnp.bfloat16)
    o2c = jax.random.normal(k8, (B3, D3), dtype=jnp.bfloat16)
    lblc = jax.random.bernoulli(k9, 0.5, (B3, 1)).astype(jnp.float32)

    loss3 = contrastive_loss(o1c, o2c, lblc, tile_b=8)
    jax.block_until_ready(loss3)
    ref3 = contrastive_loss_ref(o1c, o2c, lblc)
    assert jnp.allclose(loss3, ref3, rtol=2e-5, atol=1e-5), (loss3, ref3)

    print("KERNEL_OK")
</pallas_src>

<mosaic_0001>
module attributes {stable_mosaic.version = 11 : i64} {
  func.func @_contrastive_loss_kernel(%arg0: i32, %arg1: i32, %arg2: memref<8x32xf32, #tpu.memory_space<vmem>>, %arg3: memref<8x32xf32, #tpu.memory_space<vmem>>, %arg4: memref<8x1xf32, #tpu.memory_space<vmem>>, %arg5: memref<1x1x128xf32, #tpu.memory_space<vmem>>, %arg6: memref<8x1xf32, #tpu.memory_space<vmem>>) attributes {dimension_semantics = [#tpu.dimension_semantics<parallel>, #tpu.dimension_semantics<arbitrary>], iteration_bounds = array<i64: 2, 1>, scalar_prefetch = 0 : i64, scratch_operands = 1 : i64, tpu.core_type = #tpu.core_type<tc>, window_params = [{transform_indices = @transform_0, window_bounds = array<i64: 8, 32>}, {transform_indices = @transform_1, window_bounds = array<i64: 8, 32>}, {transform_indices = @transform_2, window_bounds = array<i64: 8, 1>}, {transform_indices = @transform_3, window_bounds = array<i64: 1, 1, 128>}]} {
    %c0_i32 = arith.constant 0 : i32
    %0 = arith.cmpi eq, %arg1, %c0_i32 : i32
    %1 = arith.extui %0 : i1 to i32
    %c0_i32_0 = arith.constant 0 : i32
    %2 = arith.cmpi ne, %1, %c0_i32_0 : i32
    scf.if %2 {
      %cst_19 = arith.constant 0.000000e+00 : f32
      %42 = vector.broadcast %cst_19 : f32 to vector<8x1xf32>
      %c0_20 = arith.constant 0 : index
      %c0_21 = arith.constant 0 : index
      %43 = vector.load %arg6[%c0_20, %c0_21] : memref<8x1xf32, #tpu.memory_space<vmem>>, vector<8x1xf32>
      tpu.vector_store %arg6[%c0_20, %c0_21], %42 {strides = array<i32>} : memref<8x1xf32, #tpu.memory_space<vmem>>, vector<8x1xf32>,
    } else {
    }
    %c0 = arith.constant 0 : index
    %c0_1 = arith.constant 0 : index
    %3 = vector.load %arg2[%c0, %c0_1] : memref<8x32xf32, #tpu.memory_space<vmem>>, vector<8x32xf32>
    %c0_2 = arith.constant 0 : index
    %c0_3 = arith.constant 0 : index
    %4 = vector.load %arg3[%c0_2, %c0_3] : memref<8x32xf32, #tpu.memory_space<vmem>>, vector<8x32xf32>
    %c0_4 = arith.constant 0 : index
    %c0_5 = arith.constant 0 : index
    %5 = vector.load %arg4[%c0_4, %c0_5] : memref<8x1xf32, #tpu.memory_space<vmem>>, vector<8x1xf32>
    %c1_i32 = arith.constant 1 : i32
    %6 = arith.muli %arg0, %c1_i32 : i32
    %7 = arith.addi %6, %arg1 : i32
    %c8_i32 = arith.constant 8 : i32
    %8 = arith.muli %7, %c8_i32 : i32
    %9 = tpu.iota {dimensions = array<i32: 0>} : vector<8x1xi32>
    %10 = vector.broadcast %8 : i32 to vector<8x1xi32>
    %11 = arith.addi %10, %9 : vector<8x1xi32>
    %c8_i32_6 = arith.constant 8 : i32
    %12 = vector.broadcast %c8_i32_6 : i32 to vector<8x1xi32>
    %13 = arith.cmpi slt, %11, %12 : vector<8x1xi32>
    %14 = arith.subf %3, %4 : vector<8x32xf32>
    %cst = arith.constant 9.99999997E-7 : f32
    %15 = vector.broadcast %cst : f32 to vector<8x32xf32>
    %16 = arith.addf %14, %15 : vector<8x32xf32>
    %17 = arith.mulf %16, %16 : vector<8x32xf32>
    %cst_7 = arith.constant dense<0.000000e+00> : vector<8xf32>
    %18 = vector.multi_reduction <add>, %17, %cst_7 [1] : vector<8x32xf32> to vector<8xf32>
    %19 = vector.shape_cast %18 : vector<8xf32> to vector<8x1xf32>
    %20 = math.sqrt %19 : vector<8x1xf32>
    %cst_8 = arith.constant 0.000000e+00 : f32
    %21 = vector.broadcast %cst_8 : f32 to vector<8x1xf32>
    %22 = arith.select %13, %5, %21 : vector<8x1xi1>, vector<8x1xf32>
    %cst_9 = arith.constant 2.000000e+00 : f32
    %23 = vector.broadcast %cst_9 : f32 to vector<8x1xf32>
    %24 = arith.subf %23, %20 : vector<8x1xf32>
    %cst_10 = arith.constant 0.000000e+00 : f32
    %25 = vector.broadcast %cst_10 : f32 to vector<8x1xf32>
    %26 = arith.maximumf %24, %25 : vector<8x1xf32>
    %cst_11 = arith.constant 1.000000e+00 : f32
    %27 = vector.broadcast %cst_11 : f32 to vector<8x1xf32>
    %28 = arith.subf %27, %22 : vector<8x1xf32>
    %29 = arith.mulf %20, %20 : vector<8x1xf32>
    %30 = arith.mulf %28, %29 : vector<8x1xf32>
    %31 = arith.mulf %26, %26 : vector<8x1xf32>
    %32 = arith.mulf %22, %31 : vector<8x1xf32>
    %33 = arith.addf %30, %32 : vector<8x1xf32>
    %cst_12 = arith.constant 0.000000e+00 : f32
    %34 = vector.broadcast %cst_12 : f32 to vector<8x1xf32>
    %35 = arith.select %13, %33, %34 : vector<8x1xi1>, vector<8x1xf32>
    %c0_13 = arith.constant 0 : index
    %c0_14 = arith.constant 0 : index
    %36 = vector.load %arg6[%c0_13, %c0_14] : memref<8x1xf32, #tpu.memory_space<vmem>>, vector<8x1xf32>
    %37 = arith.addf %36, %35 : vector<8x1xf32>
    %c0_15 = arith.constant 0 : index
    %c0_16 = arith.constant 0 : index
    %38 = vector.load %arg6[%c0_15, %c0_16] : memref<8x1xf32, #tpu.memory_space<vmem>>, vector<8x1xf32>
    tpu.vector_store %arg6[%c0_15, %c0_16], %37 {strides = array<i32>} : memref<8x1xf32, #tpu.memory_space<vmem>>, vector<8x1xf32>,
    %c0_i32_17 = arith.constant 0 : i32
    %39 = arith.cmpi eq, %arg1, %c0_i32_17 : i32
    %40 = arith.extui %39 : i1 to i32
    %c0_i32_18 = arith.constant 0 : i32
    %41 = arith.cmpi ne, %40, %c0_i32_18 : i32
    scf.if %41 {
      %c0_19 = arith.constant 0 : index
      %c0_20 = arith.constant 0 : index
      %42 = vector.load %arg6[%c0_19, %c0_20] : memref<8x1xf32, #tpu.memory_space<vmem>>, vector<8x1xf32>
      %43 = vector.shape_cast %42 : vector<8x1xf32> to vector<1x8x1xf32>
      %cst_21 = arith.constant dense<0.000000e+00> : vector<1xf32>
      %44 = vector.multi_reduction <add>, %43, %cst_21 [1, 2] : vector<1x8x1xf32> to vector<1xf32>
      %45 = vector.shape_cast %44 : vector<1xf32> to vector<1x1x1xf32>
      %46 = vector.extract %45[0, 0, 0] : f32 from vector<1x1x1xf32>
      %47 = vector.broadcast %46 : f32 to vector<1x1x128xf32>
      %c0_22 = arith.constant 0 : index
      %c0_23 = arith.constant 0 : index
      %c0_24 = arith.constant 0 : index
      %48 = vector.load %arg5[%c0_22, %c0_23, %c0_24] : memref<1x1x128xf32, #tpu.memory_space<vmem>>, vector<1x1x128xf32>
      tpu.vector_store %arg5[%c0_22, %c0_23, %c0_24], %47 {strides = array<i32>} : memref<1x1x128xf32, #tpu.memory_space<vmem>>, vector<1x1x128xf32>,
    } else {
    }
    return
  }
  func.func @transform_0(%arg0: i32, %arg1: i32) -> (i32, i32) {
    %c1_i32 = arith.constant 1 : i32
    %0 = arith.muli %arg0, %c1_i32 : i32
    %1 = arith.addi %0, %arg1 : i32
    %c0_i32 = arith.constant 0 : i32
    %2 = arith.minsi %1, %c0_i32 : i32
    %c0_i32_0 = arith.constant 0 : i32
    %c0_i32_1 = arith.constant 0 : i32
    return %2, %c0_i32_0 : i32, i32
  }
  func.func @transform_1(%arg0: i32, %arg1: i32) -> (i32, i32) {
    %c1_i32 = arith.constant 1 : i32
    %0 = arith.muli %arg0, %c1_i32 : i32
    %1 = arith.addi %0, %arg1 : i32
    %c0_i32 = arith.constant 0 : i32
    %2 = arith.minsi %1, %c0_i32 : i32
    %c0_i32_0 = arith.constant 0 : i32
    %c0_i32_1 = arith.constant 0 : i32
    return %2, %c0_i32_0 : i32, i32
  }
  func.func @transform_2(%arg0: i32, %arg1: i32) -> (i32, i32) {
    %c1_i32 = arith.constant 1 : i32
    %0 = arith.muli %arg0, %c1_i32 : i32
    %1 = arith.addi %0, %arg1 : i32
    %c0_i32 = arith.constant 0 : i32
    %2 = arith.minsi %1, %c0_i32 : i32
    %c0_i32_0 = arith.constant 0 : i32
    %c0_i32_1 = arith.constant 0 : i32
    return %2, %c0_i32_0 : i32, i32
  }
  func.func @transform_3(%arg0: i32, %arg1: i32) -> (i32, i32, i32) {
    %c0_i32 = arith.constant 0 : i32
    %c0_i32_0 = arith.constant 0 : i32
    %c0_i32_1 = arith.constant 0 : i32
    return %arg0, %c0_i32, %c0_i32_0 : i32, i32, i32
  }
}

</mosaic_0001>

<llo_original>
// kernel: tpu_custom_call.1
$region0: #{tpu_custom_call.1}
  #allocation0 [shape = 'u32[]', space=smem, size = 0x4, offset = 0x4, fixed_abs, tag = 'smem constant byte address 0x4 - core index']
  #allocation1 [shape = 'u32[144,128]{1,0:T(1,128)}', space=vmem, size = 0x12000, scoped, tag = 'internal scratch']
  #allocation2 [shape = 'f32[8,1]{1,0:T(8,128)}', space=vmem, size = 0x1000, scoped, tag = 'scratch operand']
  %s0 = inlined_call_operand.vmem [shape: f32[8,32], index: 0, kind: input, shape index: {}]
  %s1 = inlined_call_operand.hbm [shape: f32[8,32], index: 1, kind: input, shape index: {}]
  %s2 = inlined_call_operand.vmem [shape: f32[8,1], index: 2, kind: input, shape index: {}]
  %s3 = inlined_call_operand.hbm [shape: f32[2,1,128], index: 3, kind: output, shape index: {}]
  %s4 = sld [smem:[#allocation0]]
  $region57: #{tpu_custom_call.1} parent=0
    _
  %s6 = ssub.s32 1, %s4
  %s7 = scalar_select 0, %s6, %s4
  $region1: #{tpu_custom_call.1} parent=0
    #allocation3 [shape = 'u8[8192]{0}', space=vmem, size = 0x2000, scoped, tag = 'input window, operand 1']
    #allocation4 [shape = 's32[2]{0}', space=sflag, size = 0x8, scoped, tag = 'scoped memory for tpu_custom_call.1']
    #allocation5 [shape = 's32[2]{0}', space=sflag, size = 0x8, scoped, tag = 'scoped memory for tpu_custom_call.1']
    #allocation6 [shape = 'u8[1024]{0}', space=vmem, size = 0x400, scoped, tag = 'output window, operand 0']
    %8 = vsyncpa [#allocation4], 0
    %s9 = scalar_lea.sflag [#allocation4], 1
    %10 = vsyncpa %s9, 0
    %11 = vsyncpa [#allocation5], 0
    %s12 = scalar_lea.sflag [#allocation5], 1
    %13 = vsyncpa %s12, 0
    loop: start=0, step=1, limit=4
    $region2: #{tpu_custom_call.1} parent=1 // loop_pre_header
      _
    $region3: #{tpu_custom_call.1} parent=1 // loop_header
      %s15 = sphi 0, %s19
      %p16 = scmp.ge.s32.totalorder %s15, 4
      %s22 = sphi 0, %s34
      %s23 = sphi 0, %s30
      %s24 = sphi 0, %s22
      %s25 = sphi 0, %s23
      %s26 = sphi 0, %s24
      %s27 = sphi 0, %s25
      %s43 = sphi 0, %s45
      %s46 = sphi 0, %s43
      %s47 = sphi 0, %s46
      %s63 = sphi 0, %s47
      %s75 = sphi 0, %s77
      %s78 = sphi 0, %s75
      %s79 = sphi 0, %s78
      %s95 = sphi 0, %s79
      %s107 = sphi 0, %s109
      %s110 = sphi 0, %s107
      %s111 = sphi 0, %s110
      %s127 = sphi 0, %s111
      %s133 = sphi 0, %s135
      %s136 = sphi 0, %s133
      %s137 = sphi 0, %s136
      %s153 = sphi 0, %s137
    $region4: #{tpu_custom_call.1} parent=1 // loop_header_branch
      %18 = sbr.rel (%p16) target = $region8
    $region5: #{tpu_custom_call.1} parent=1 // loop_body
      %s20 = ssub.s32 %s15, 1
      %s21 = ssub.s32 %s15, 2
      %s28 = sadd.s32 1, %s23
      %p29 = scmp.ge.s32.totalorder %s28, 1
      %s30 = scalar_select %p29, 0, %s28
      %s31 = sadd.s32 1, %s22
      %s32 = scalar_select %p29, %s31, %s22
      %p33 = scmp.ge.s32.totalorder %s32, 2
      %s34 = scalar_select %p33, 0, %s32
      %s35 = sadd.s32 %s22, %s23
      %p36 = scmp.lt.s32.totalorder %s35, 0
      %s37 = scalar_select %p36, %s35, 0
      %s38 = sadd.s32 %s34, %s30
      %p39 = scmp.lt.s32.totalorder %s38, 0
      %s40 = scalar_select %p39, %s38, 0
      %s41 = ssub.s32 %s37, %s40
      %p42 = scmp.eq.s32.totalorder %s41, 0
      %s44 = sadd.s32 %s43, 1
      %s45 = scalar_select %p42, %s43, %s44
      %p48 = pneg %p42
      %p49 = scmp.eq.s32.totalorder %s15, 1
      %p50 = por %p48, %p49
      %p51 = scmp.ne.s32.totalorder %s43, %s46
      %p52 = scmp.eq.s32.totalorder %s15, 0
      %p53 = por %p51, %p52
      %p54 = scmp.ne.s32.totalorder %s43, %s46
      %p55 = scmp.eq.s32.totalorder %s20, 1
      %p56 = por %p54, %p55
      %p57 = scmp.ne.s32.totalorder %s46, %s47
      %p58 = scmp.eq.s32.totalorder %s20, 0
      %p59 = por %p57, %p58
      %p60 = scmp.ne.s32.totalorder %s46, %s47
      %p61 = scmp.eq.s32.totalorder %s21, 1
      %p62 = por %p60, %p61
      %p64 = scmp.ne.s32.totalorder %s47, %s63
      %p65 = scmp.eq.s32.totalorder %s21, 0
      %p66 = por %p64, %p65
      %s67 = sadd.s32 %s22, %s23
      %p68 = scmp.lt.s32.totalorder %s67, 0
      %s69 = scalar_select %p68, %s67, 0
      %s70 = sadd.s32 %s34, %s30
      %p71 = scmp.lt.s32.totalorder %s70, 0
      %s72 = scalar_select %p71, %s70, 0
      %s73 = ssub.s32 %s69, %s72
      %p74 = scmp.eq.s32.totalorder %s73, 0
      %s76 = sadd.s32 %s75, 1
      %s77 = scalar_select %p74, %s75, %s76
      %p80 = pneg %p74
      %p81 = scmp.eq.s32.totalorder %s15, 1
      %p82 = por %p80, %p81
      %p83 = scmp.ne.s32.totalorder %s75, %s78
      %p84 = scmp.eq.s32.totalorder %s15, 0
      %p85 = por %p83, %p84
      %p86 = scmp.ne.s32.totalorder %s75, %s78
      %p87 = scmp.eq.s32.totalorder %s20, 1
      %p88 = por %p86, %p87
      %p89 = scmp.ne.s32.totalorder %s78, %s79
      %p90 = scmp.eq.s32.totalorder %s20, 0
      %p91 = por %p89, %p90
      %p92 = scmp.ne.s32.totalorder %s78, %s79
      %p93 = scmp.eq.s32.totalorder %s21, 1
      %p94 = por %p92, %p93
      %p96 = scmp.ne.s32.totalorder %s79, %s95
      %p97 = scmp.eq.s32.totalorder %s21, 0
      %p98 = por %p96, %p97
      %s99 = sadd.s32 %s22, %s23
      %p100 = scmp.lt.s32.totalorder %s99, 0
      %s101 = scalar_select %p100, %s99, 0
      %s102 = sadd.s32 %s34, %s30
      %p103 = scmp.lt.s32.totalorder %s102, 0
      %s104 = scalar_select %p103, %s102, 0
      %s105 = ssub.s32 %s101, %s104
      %p106 = scmp.eq.s32.totalorder %s105, 0
      %s108 = sadd.s32 %s107, 1
      %s109 = scalar_select %p106, %s107, %s108
      %p112 = pneg %p106
      %p113 = scmp.eq.s32.totalorder %s15, 1
      %p114 = por %p112, %p113
      %p115 = scmp.ne.s32.totalorder %s107, %s110
      %p116 = scmp.eq.s32.totalorder %s15, 0
      %p117 = por %p115, %p116
      %p118 = scmp.ne.s32.totalorder %s107, %s110
      %p119 = scmp.eq.s32.totalorder %s20, 1
      %p120 = por %p118, %p119
      %p121 = scmp.ne.s32.totalorder %s110, %s111
      %p122 = scmp.eq.s32.totalorder %s20, 0
      %p123 = por %p121, %p122
      %p124 = scmp.ne.s32.totalorder %s110, %s111
      %p125 = scmp.eq.s32.totalorder %s21, 1
      %p126 = por %p124, %p125
      %p128 = scmp.ne.s32.totalorder %s111, %s127
      %p129 = scmp.eq.s32.totalorder %s21, 0
      %p130 = por %p128, %p129
      %s131 = ssub.s32 %s22, %s34
      %p132 = scmp.eq.s32.totalorder %s131, 0
      %s134 = sadd.s32 %s133, 1
      %s135 = scalar_select %p132, %s133, %s134
      %p138 = pneg %p132
      %p139 = scmp.eq.s32.totalorder %s15, 1
      %p140 = por %p138, %p139
      %p141 = scmp.ne.s32.totalorder %s133, %s136
      %p142 = scmp.eq.s32.totalorder %s15, 0
      %p143 = por %p141, %p142
      %p144 = scmp.ne.s32.totalorder %s133, %s136
      %p145 = scmp.eq.s32.totalorder %s20, 1
      %p146 = por %p144, %p145
      %p147 = scmp.ne.s32.totalorder %s136, %s137
      %p148 = scmp.eq.s32.totalorder %s20, 0
      %p149 = por %p147, %p148
      %p150 = scmp.ne.s32.totalorder %s136, %s137
      %p151 = scmp.eq.s32.totalorder %s21, 1
      %p152 = por %p150, %p151
      %p154 = scmp.ne.s32.totalorder %s137, %s153
      %p155 = scmp.eq.s32.totalorder %s21, 0
      %p156 = por %p154, %p155
      %p157 = scmp.le.s32.totalorder 1, %s15
      %p158 = scmp.lt.s32.totalorder %s15, 3
      %p159 = pnand %p157, %p158
      %p160 = pneg %p159
      // Predicated region
      $region9: #{tpu_custom_call.1} parent=5 // pred_check
        _
      $region10: #{tpu_custom_call.1} parent=5 // pred_check_branch
        %162 = sbr.rel (%p159) target = $region12
      $region11: #{tpu_custom_call.1} parent=5 // pred_region
        %s163 = ssub.s32 %s15, 1
      $region12: #{tpu_custom_call.1} parent=5 // pred_fallthru
        _
      %p164 = scmp.lt.s32.totalorder %s15, 2
      // Predicated region
      $region13: #{tpu_custom_call.1} parent=5 // pred_check
        %p165 = pneg %p164
      $region14: #{tpu_custom_call.1} parent=5 // pred_check_branch
        %167 = sbr.rel (%p165) target = $region16
      $region15: #{tpu_custom_call.1} parent=5 // pred_region
        // Predicated region
        $region17: #{tpu_custom_call.1} parent=15 // pred_check
          %p168 = pneg %p53
        $region18: #{tpu_custom_call.1} parent=15 // pred_check_branch
          %170 = sbr.rel (%p168) target = $region20
        $region19: #{tpu_custom_call.1} parent=15 // pred_region
          %s171 = sadd.s32 %s22, %s23
          %p172 = scmp.lt.s32.totalorder %s171, 0
          %s173 = scalar_select %p172, %s171, 0
          %p174 = scmp.lt.s32.totalorder %s173, 0
          %s175 = scalar_select %p174, %s173, 0
          %s176 = smul.addr %s175, 8
          %s177 = scalar_lea.vmem %s0, %s176
          %s178 = sadd.s32 %s22, %s23
          %p179 = scmp.lt.s32.totalorder %s178, 0
          %s180 = scalar_select %p179, %s178, 0
        $region20: #{tpu_custom_call.1} parent=15 // pred_fallthru
          _
        // Predicated region
        $region21: #{tpu_custom_call.1} parent=15 // pred_check
          %p181 = pneg %p85
        $region22: #{tpu_custom_call.1} parent=15 // pred_check_branch
          %183 = sbr.rel (%p181) target = $region24
        $region23: #{tpu_custom_call.1} parent=15 // pred_region
          %s184 = sand.u32 %s75, 1
          %s185 = scalar_lea.sflag [#allocation4], %s184
          %s186 = sand.u32 %s75, 1
          %s187 = smul.addr %s186, 8
          %s188 = scalar_lea.vmem [#allocation3], %s187
          %s189 = sadd.s32 %s22, %s23
          %p190 = scmp.lt.s32.totalorder %s189, 0
          %s191 = scalar_select %p190, %s189, 0
          %s193 = ssub.s32 128, 128
          %194 = vsyncadd %s185, %s193
          %s195 = smul.addr %s191, 128
          %s196 = scalar_lea.hbm %s1, %s195
          %s198 = sshll.u32 %s188, 4
          %s199 = int_to_ptr.vmem [resolvable:$true] %s198
          %201 = dma.hbm_to_vmem [thread:$0]  %s196, 128, %s199, %s185
        $region24: #{tpu_custom_call.1} parent=15 // pred_fallthru
          _
        // Predicated region
        $region25: #{tpu_custom_call.1} parent=15 // pred_check
          %p202 = pneg %p117
        $region26: #{tpu_custom_call.1} parent=15 // pred_check_branch
          %204 = sbr.rel (%p202) target = $region28
        $region27: #{tpu_custom_call.1} parent=15 // pred_region
          %s205 = sadd.s32 %s22, %s23
          %p206 = scmp.lt.s32.totalorder %s205, 0
          %s207 = scalar_select %p206, %s205, 0
          %p208 = scmp.lt.s32.totalorder %s207, 0
          %s209 = scalar_select %p208, %s207, 0
          %s210 = smul.addr %s209, 8
          %s211 = scalar_lea.vmem %s2, %s210
          %s212 = sadd.s32 %s22, %s23
          %p213 = scmp.lt.s32.totalorder %s212, 0
          %s214 = scalar_select %p213, %s212, 0
        $region28: #{tpu_custom_call.1} parent=15 // pred_fallthru
          _
      $region16: #{tpu_custom_call.1} parent=5 // pred_fallthru
        _
      %p215 = scmp.le.s32.totalorder 1, %s15
      %p216 = scmp.lt.s32.totalorder %s15, 3
      %p217 = pnand %p215, %p216
      %p218 = pneg %p217
      // Predicated region
      $region29: #{tpu_custom_call.1} parent=5 // pred_check
        _
      $region30: #{tpu_custom_call.1} parent=5 // pred_check_branch
        %220 = sbr.rel (%p217) target = $region32
      $region31: #{tpu_custom_call.1} parent=5 // pred_region
        %s221 = ssub.s32 %s15, 1
        %s222 = sand.u32 %s78, 1
        %s223 = scalar_lea.sflag [#allocation4], %s222
        %s224 = sand.u32 %s78, 1
        %s225 = smul.addr %s224, 8
        %s226 = scalar_lea.vmem [#allocation3], %s225
        // Predicated region
        $region33: #{tpu_custom_call.1} parent=31 // pred_check
          %p227 = pneg %p91
        $region34: #{tpu_custom_call.1} parent=31 // pred_check_branch
          %229 = sbr.rel (%p227) target = $region36
        $region35: #{tpu_custom_call.1} parent=31 // pred_region
          %230 = dma.done %s223, 128
        $region36: #{tpu_custom_call.1} parent=31 // pred_fallthru
          _
        %s231 = sadd.s32 %s24, %s25
        %p232 = scmp.lt.s32.totalorder %s231, 0
        %s233 = scalar_select %p232, %s231, 0
        %p234 = scmp.lt.s32.totalorder %s233, 0
        %s235 = scalar_select %p234, %s233, 0
        %s236 = smul.addr %s235, 8
        %s237 = scalar_lea.vmem %s0, %s236
        %p238 = pneg %p59
        %p239 = pneg %p56
        %s240 = sand.u32 %s78, 1
        %s241 = scalar_lea.sflag [#allocation4], %s240
        %s242 = sand.u32 %s78, 1
        %s243 = smul.addr %s242, 8
        %s244 = scalar_lea.vmem [#allocation3], %s243
        %p245 = pneg %p91
        %p246 = pneg %p88
        %s247 = sadd.s32 %s24, %s25
        %p248 = scmp.lt.s32.totalorder %s247, 0
        %s249 = scalar_select %p248, %s247, 0
        %p250 = scmp.lt.s32.totalorder %s249, 0
        %s251 = scalar_select %p250, %s249, 0
        %s252 = smul.addr %s251, 8
        %s253 = scalar_lea.vmem %s2, %s252
        %p254 = pneg %p123
        %p255 = pneg %p120
        %p256 = pneg %p149
        %p257 = pneg %p146
        %s258 = sand.u32 %s136, 1
        %s259 = scalar_lea.sflag [#allocation5], %s258
        %s260 = sand.u32 %s136, 1
        %s261 = scalar_lea.vmem [#allocation6], %s260
        %s262 = sadd.s32 %s24, %s25
        %p263 = scmp.lt.s32.totalorder %s262, 0
        %s264 = scalar_select %p263, %s262, 0
        %p265 = scmp.lt.s32.totalorder %s264, 0
        %s266 = scalar_select %p265, %s264, 0
        %s267 = smul.addr %s266, 8
        %s268 = scalar_lea.vmem %s0, %s267
        %s269 = sadd.s32 %s24, %s25
        %p270 = scmp.lt.s32.totalorder %s269, 0
        %s271 = scalar_select %p270, %s269, 0
        %s272 = sadd.s32 %s24, %s25
        %p273 = scmp.lt.s32.totalorder %s272, 0
        %s274 = scalar_select %p273, %s272, 0
        %s275 = sadd.s32 %s24, %s25
        %p276 = scmp.lt.s32.totalorder %s275, 0
        %s277 = scalar_select %p276, %s275, 0
        %p278 = scmp.lt.s32.totalorder %s277, 0
        %s279 = scalar_select %p278, %s277, 0
        %s280 = smul.addr %s279, 8
        %s281 = scalar_lea.vmem %s2, %s280
        %s282 = sadd.s32 %s24, %s25
        %p283 = scmp.lt.s32.totalorder %s282, 0
        %s284 = scalar_select %p283, %s282, 0
        %p285 = scmp.eq.s32.totalorder %s25, 0
        // Predicated region
        $region37: #{tpu_custom_call.1} parent=31 // pred_check
          %p286 = pneg %p285
        $region38: #{tpu_custom_call.1} parent=31 // pred_check_branch
          %288 = sbr.rel (%p286) target = $region40
        $region39: #{tpu_custom_call.1} parent=31 // pred_region
          %vm289 = vcmask 7168
          %290 = vst.msk [vmem:[#allocation2] sm:$0xff] %vm289, 0.0
        $region40: #{tpu_custom_call.1} parent=31 // pred_fallthru
          _
        %v291 = vld [vmem:[%s268] sm:$0xff]
        %v292 = vld [vmem:[%s226] sm:$0xff]
        %v293 = vld [vmem:[%s281] sm:$0xff]
        %s294 = sadd.s32 %s24, %s25
        %s295 = smul.u32 %s294, 8
        %v296 = vlaneseq
        %v297 = vshrl.u32 %v296, 7
        %v298 = vstv %s295
        %v299 = vadd.s32 %v298, %v297
        %vm300 = vcmp.lt.s32.totalorder %v299, 8
        %v301 = vsub.f32 %v291, %v292
        %v302 = vadd.f32 %v301, 1e-06
        %v303 = vmul.f32 %v302, %v302
        %vm304 = vcmask 261120
        %v305 = vsel %vm304, %v303, 0.0
        %306 = vadd.xlane.f32.xlu0 %v305
        %v307 = vpop.xlane.xlu0 %306
        %v308 = vrsqrt.pop %v307
        %v309 = vmul.f32 %v307, %v308
        %vm310 = vcmp.eq.f32.partialorder %v307, inf
        %v311 = vsel %vm310, %v307, %v309
        %vm312 = vcmp.eq.f32.partialorder %v307, 0.0
        %v313 = vand.u32 %v307, 2147483648
        %v314 = vsel %vm312, %v313, %v311
        %v315 = vsel %vm300, %v293, 0.0
        %v316 = vsub.f32 2.0, %v314
        %v317 = vmax.f32 %v316, 0.0
        %v318 = vsub.f32 1.0, %v315
        %v319 = vmul.f32 %v314, %v314
        %v320 = vmul.f32 %v318, %v319
        %v321 = vmul.f32 %v317, %v317
        %v322 = vmul.f32 %v315, %v321
        %v323 = vadd.f32 %v320, %v322
        %v324 = vsel %vm300, %v323, 0.0
        %v325 = vld [vmem:[#allocation2] sm:$0xff]
        %v326 = vadd.f32 %v325, %v324
        %vm327 = vcmask 7168
        %328 = vst.msk [vmem:[#allocation2] sm:$0xff] %vm327, %v326
        // Predicated region
        $region41: #{tpu_custom_call.1} parent=31 // pred_check
          %p329 = pneg %p285
        $region42: #{tpu_custom_call.1} parent=31 // pred_check_branch
          %331 = sbr.rel (%p329) target = $region44
        $region43: #{tpu_custom_call.1} parent=31 // pred_region
          %v332 = vld [vmem:[#allocation2] sm:$0xff]
          %v333 = vsel %vm327, %v332, 0.0
          %334 = vadd.xlane.f32.xlu0 %v333
          %v335 = vpop.xlane.xlu0 %334
          %v336 = vrot.slane %v335, 4
          %v337 = vadd.f32 %v335, %v336
          %v338 = vrot.slane %v337, 2
          %v339 = vadd.f32 %v337, %v338
          %v340 = vrot.slane %v339, 1
          %v341 = vadd.f32 %v339, %v340
          %s342 = vtos %v341
          %v343 = vstv %s342
          %344 = vst [vmem:[%s261] sm:$0x1] %v343
        $region44: #{tpu_custom_call.1} parent=31 // pred_fallthru
          _
        %s345 = sand.u32 %s136, 1
        %s346 = scalar_lea.sflag [#allocation5], %s345
        %s347 = sand.u32 %s136, 1
        %s348 = scalar_lea.vmem [#allocation6], %s347
        // Predicated region
        $region45: #{tpu_custom_call.1} parent=31 // pred_check
          %p349 = pneg %p146
        $region46: #{tpu_custom_call.1} parent=31 // pred_check_branch
          %351 = sbr.rel (%p349) target = $region48
        $region47: #{tpu_custom_call.1} parent=31 // pred_region
          %s353 = ssub.s32 16, 16
          %354 = vsyncadd %s346, %s353
          %s355 = smul.addr %s24, 16
          %s356 = scalar_lea.hbm %s3, %s355
          %s358 = sshll.u32 %s348, 4
          %s359 = int_to_ptr.vmem [resolvable:$true] %s358
          %361 = dma.vmem_to_hbm [thread:$0]  %s359, 16, %s356, %s346
        $region48: #{tpu_custom_call.1} parent=31 // pred_fallthru
          _
      $region32: #{tpu_custom_call.1} parent=5 // pred_fallthru
        _
      %p362 = scmp.le.s32.totalorder 2, %s15
      // Predicated region
      $region49: #{tpu_custom_call.1} parent=5 // pred_check
        %p363 = pneg %p362
      $region50: #{tpu_custom_call.1} parent=5 // pred_check_branch
        %365 = sbr.rel (%p363) target = $region52
      $region51: #{tpu_custom_call.1} parent=5 // pred_region
        %s366 = ssub.s32 %s15, 2
        // Predicated region
        $region53: #{tpu_custom_call.1} parent=51 // pred_check
          %p367 = pneg %p152
        $region54: #{tpu_custom_call.1} parent=51 // pred_check_branch
          %369 = sbr.rel (%p367) target = $region56
        $region55: #{tpu_custom_call.1} parent=51 // pred_region
          %s370 = sand.u32 %s137, 1
          %s371 = scalar_lea.sflag [#allocation5], %s370
          %s372 = sand.u32 %s137, 1
          %s373 = scalar_lea.vmem [#allocation6], %s372
          %374 = dma.done %s371, 16
        $region56: #{tpu_custom_call.1} parent=51 // pred_fallthru
          _
      $region52: #{tpu_custom_call.1} parent=5 // pred_fallthru
        _
    $region6: #{tpu_custom_call.1} parent=1 // loop_footer
      %s19 = sadd.s32 1, %s15
    $region7: #{tpu_custom_call.1} parent=1 // loop_footer_branch
      %14 = sbr.rel target = $region3
    $region8: #{tpu_custom_call.1} parent=1 // loop_exit
      _
    %375 = vsyncpa [#allocation4], 1
    %s376 = scalar_lea.sflag [#allocation4], 1
    %377 = vsyncpa %s376, 1
    %378 = vsyncpa [#allocation5], 1
    %s379 = scalar_lea.sflag [#allocation5], 1
    %380 = vsyncpa %s379, 1

</llo_original>
